<compile_context>
chip_gen: v7x
topology: tpu7x:2x2x1
jax: 0.10.0
libtpu: 0.0.40
codegen_flags: <defaults>
</compile_context>

<pallas_src>
import math

import jax
import jax.numpy as jnp
import numpy as np
from jax.experimental import pallas as pl
from jax.experimental.pallas import tpu as pltpu


def _attn_kernel(xall_ref, wqkv_ref, mask_ref, o_ref):
    B, Sq, Sk = mask_ref.shape

    x_all = xall_ref[...]                       # (Sq + B*Sk, Din), VMEM-resident
    x1 = x_all[:Sq]                             # rows [0, Sq): Sq is a multiple of 8 -> free
    x2f = x_all[Sq:]                            # rows [Sq, Sq+B*Sk): flattened batch of x2

    # Projections: three small MXU pushes against leading-axis blocks of the
    # single fused weight operand (no sub-tile lane slicing anywhere).
    # 1/sqrt(x1.size(-1)) is already folded into wqkv[0] by the wrapper.
    q = jnp.dot(x1, wqkv_ref[0], preferred_element_type=jnp.float32)    # (Sq, D)
    kf = jnp.dot(x2f, wqkv_ref[1], preferred_element_type=jnp.float32)  # (B*Sk, D)
    vf = jnp.dot(x2f, wqkv_ref[2], preferred_element_type=jnp.float32)  # (B*Sk, D)
    D = q.shape[-1]

    # Scores without materializing a broadcast of q: one flat contraction
    # (B*Sk, D) x (Sq, D) -> (B*Sk, Sq), then a free major-dim reshape and a
    # minor-dim (last-two-axes) transpose into (B, Sq, Sk).
    sT = jax.lax.dot_general(kf, q, (((1,), (1,)), ((), ())),
                             preferred_element_type=jnp.float32)        # (B*Sk, Sq)
    s = jnp.swapaxes(sT.reshape(B, Sk, Sq), -1, -2) + mask_ref[...]     # (B, Sq, Sk)

    # Numerically stable softmax (matches torch.softmax); exact reciprocal to
    # stay inside the 2e-5 tolerance (approx=True is too coarse here).
    m = jnp.max(s, axis=-1, keepdims=True)
    p = jnp.exp(s - m)
    denom = jnp.sum(p, axis=-1, keepdims=True)
    attn = p * pl.reciprocal(denom, approx=False)

    # Batched attn @ v on the MXU.
    v = vf.reshape(B, Sk, D)
    out = jax.lax.dot_general(attn, v, (((2,), (1,)), ((0,), (0,))),
                              preferred_element_type=jnp.float32)       # (B, Sq, D)
    o_ref[...] = out.astype(o_ref.dtype)


def prepare_weights(wq, wk, wv, query_feature_dim):
    """One-time layout prep: torch Linear (out, in) -> stacked (3, in, out).

    The attention scale 1/sqrt(x1.size(-1)) is folded into the query weight so
    the kernel never multiplies the score tensor.
    """
    scale = 1.0 / math.sqrt(query_feature_dim)
    return jnp.stack([wq.T * scale, wk.T, wv.T], axis=0)   # (3, Din, D)


@jax.jit
def model_forward(x1, x2, wqkv, attn_mask):
    """x1: (Sq, Din), x2: (B, Sk, Din), wqkv: (3, Din, D), attn_mask: (B, Sq, Sk)."""
    Sq, Din = x1.shape
    B, Sk, _ = x2.shape
    D = wqkv.shape[-1]

    # Single stacked activation operand: rows [0, Sq) are x1, the rest is the
    # flattened batch of x2.  Fuses under jit; one DMA instead of two.
    x_all = jnp.concatenate([x1, x2.reshape(B * Sk, Din)], axis=0)

    vmem = pl.BlockSpec(memory_space=pltpu.MemorySpace.VMEM)
    return pl.pallas_call(
        _attn_kernel,
        out_shape=jax.ShapeDtypeStruct((B, Sq, D), jnp.float32),
        in_specs=[vmem, vmem, vmem],
        out_specs=vmem,
        compiler_params=pltpu.CompilerParams(
            # Whole problem is VMEM-resident (grid=()); make the budget
            # explicit so larger shapes fail at compile time, not by spilling.
            vmem_limit_bytes=32 * 1024 * 1024,
        ),
    )(x_all, wqkv, attn_mask)


def reference_forward(x1, x2, wq, wk, wv, attn_mask):
    q = x1 @ wq.T
    k = x2 @ wk.T
    v = x2 @ wv.T
    qk = q @ jnp.swapaxes(k, -2, -1) / math.sqrt(x1.shape[-1])
    qk = qk + attn_mask
    attn = jax.nn.softmax(qk, axis=-1)
    return attn @ v


if __name__ == "__main__":
    # Hyper-parameters chosen so the forward is well-defined (the original
    # module's literal dims are mutually inconsistent): nHeads=1,
    # queryDim=keyDim=valueDim=D=32, attn_mask batch of 3, Sq=Sk=32.
    nHeads = 1
    D = 32
    B, Sq, Sk = 3, D, D

    key = jax.random.PRNGKey(0)
    k1, k2, k3, k4, k5, k6 = jax.random.split(key, 6)

    # torch.nn.Linear-like weight shapes: (out_features, in_features).
    wq = jax.random.normal(k1, (nHeads * D, D), jnp.float32) * 0.1
    wk = jax.random.normal(k2, (nHeads * D, D), jnp.float32) * 0.1
    wv = jax.random.normal(k3, (nHeads * D, D), jnp.float32) * 0.1
    attn_mask = jax.random.normal(k4, (B, Sq, Sk), jnp.float32) * 1e-5

    # Inputs.
    x1 = jax.random.normal(k5, (Sq, D), jnp.float32)
    x2 = jax.random.normal(k6, (B, Sk, D), jnp.float32)

    wqkv = prepare_weights(wq, wk, wv, x1.shape[-1])   # once, at init

    out = model_forward(x1, x2, wqkv, attn_mask)
    out = jax.block_until_ready(out)

    ref = reference_forward(x1, x2, wq, wk, wv, attn_mask)
    np.testing.assert_allclose(np.asarray(out), np.asarray(ref), atol=2e-5, rtol=2e-5)

    print("KERNEL_OK")
</pallas_src>

<mosaic_0001>
module attributes {stable_mosaic.version = 11 : i64} {
  func.func @_attn_kernel(%arg0: memref<128x32xf32, #tpu.memory_space<vmem>>, %arg1: memref<3x32x32xf32, #tpu.memory_space<vmem>>, %arg2: memref<3x32x32xf32, #tpu.memory_space<vmem>>, %arg3: memref<3x32x32xf32, #tpu.memory_space<vmem>>) attributes {dimension_semantics = [], scalar_prefetch = 0 : i64, scratch_operands = 0 : i64, tpu.core_type = #tpu.core_type<tc>} {
    %c0 = arith.constant 0 : index
    %c0_0 = arith.constant 0 : index
    %0 = vector.load %arg0[%c0, %c0_0] : memref<128x32xf32, #tpu.memory_space<vmem>>, vector<128x32xf32>
    %1 = vector.extract_strided_slice %0 {offsets = [0, 0], sizes = [32, 32], strides = [1, 1]} : vector<128x32xf32> to vector<32x32xf32>
    %2 = vector.extract_strided_slice %0 {offsets = [32, 0], sizes = [96, 32], strides = [1, 1]} : vector<128x32xf32> to vector<96x32xf32>
    %c0_1 = arith.constant 0 : index
    %c0_2 = arith.constant 0 : index
    %c0_3 = arith.constant 0 : index
    %3 = vector.load %arg1[%c0_1, %c0_2, %c0_3] : memref<3x32x32xf32, #tpu.memory_space<vmem>>, vector<1x32x32xf32>
    %4 = vector.shape_cast %3 : vector<1x32x32xf32> to vector<32x32xf32>
    %cst = arith.constant dense<0.000000e+00> : vector<32x32xf32>
    %5 = tpu.matmul %1, %4, %cst {dimension_numbers = #tpu.dot_dimension_numbers<[1], [0], [0], [1], [0, 0, 1, 1], [], []>} : vector<32x32xf32>, vector<32x32xf32>, vector<32x32xf32> -> vector<32x32xf32>
    %c1 = arith.constant 1 : index
    %c0_4 = arith.constant 0 : index
    %c0_5 = arith.constant 0 : index
    %6 = vector.load %arg1[%c1, %c0_4, %c0_5] : memref<3x32x32xf32, #tpu.memory_space<vmem>>, vector<1x32x32xf32>
    %7 = vector.shape_cast %6 : vector<1x32x32xf32> to vector<32x32xf32>
    %cst_6 = arith.constant dense<0.000000e+00> : vector<96x32xf32>
    %8 = tpu.matmul %2, %7, %cst_6 {dimension_numbers = #tpu.dot_dimension_numbers<[1], [0], [0], [1], [0, 0, 1, 1], [], []>} : vector<96x32xf32>, vector<32x32xf32>, vector<96x32xf32> -> vector<96x32xf32>
    %c2 = arith.constant 2 : index
    %c0_7 = arith.constant 0 : index
    %c0_8 = arith.constant 0 : index
    %9 = vector.load %arg1[%c2, %c0_7, %c0_8] : memref<3x32x32xf32, #tpu.memory_space<vmem>>, vector<1x32x32xf32>
    %10 = vector.shape_cast %9 : vector<1x32x32xf32> to vector<32x32xf32>
    %cst_9 = arith.constant dense<0.000000e+00> : vector<96x32xf32>
    %11 = tpu.matmul %2, %10, %cst_9 {dimension_numbers = #tpu.dot_dimension_numbers<[1], [0], [0], [1], [0, 0, 1, 1], [], []>} : vector<96x32xf32>, vector<32x32xf32>, vector<96x32xf32> -> vector<96x32xf32>
    %cst_10 = arith.constant dense<0.000000e+00> : vector<96x32xf32>
    %12 = tpu.matmul %8, %5, %cst_10 {dimension_numbers = #tpu.dot_dimension_numbers<[1], [1], [0], [0], [0, 0, 1, 0], [], []>} : vector<96x32xf32>, vector<32x32xf32>, vector<96x32xf32> -> vector<96x32xf32>
    %13 = vector.shape_cast %12 : vector<96x32xf32> to vector<3x32x32xf32>
    %14 = tpu.transpose %13, [0, 2, 1] : vector<3x32x32xf32> -> vector<3x32x32xf32>
    %c0_11 = arith.constant 0 : index
    %c0_12 = arith.constant 0 : index
    %c0_13 = arith.constant 0 : index
    %15 = vector.load %arg2[%c0_11, %c0_12, %c0_13] : memref<3x32x32xf32, #tpu.memory_space<vmem>>, vector<3x32x32xf32>
    %16 = arith.addf %14, %15 : vector<3x32x32xf32>
    %cst_14 = arith.constant dense<0xFF800000> : vector<3x32xf32>
    %17 = vector.multi_reduction <maximumf>, %16, %cst_14 [2] : vector<3x32x32xf32> to vector<3x32xf32>
    %18 = vector.shape_cast %17 : vector<3x32xf32> to vector<3x32x1xf32>
    %19 = vector.broadcast %18 : vector<3x32x1xf32> to vector<3x32x32xf32>
    %20 = arith.subf %16, %19 : vector<3x32x32xf32>
    %21 = math.exp %20 : vector<3x32x32xf32>
    %cst_15 = arith.constant dense<0.000000e+00> : vector<3x32xf32>
    %22 = vector.multi_reduction <add>, %21, %cst_15 [2] : vector<3x32x32xf32> to vector<3x32xf32>
    %23 = vector.shape_cast %22 : vector<3x32xf32> to vector<3x32x1xf32>
    %24 = tpu.reciprocal %23 : vector<3x32x1xf32> -> vector<3x32x1xf32>
    %25 = vector.broadcast %24 : vector<3x32x1xf32> to vector<3x32x32xf32>
    %26 = arith.mulf %21, %25 : vector<3x32x32xf32>
    %27 = vector.shape_cast %11 : vector<96x32xf32> to vector<3x32x32xf32>
    %cst_16 = arith.constant dense<0.000000e+00> : vector<3x32x32xf32>
    %28 = tpu.matmul %26, %27, %cst_16 {dimension_numbers = #tpu.dot_dimension_numbers<[2], [1], [1], [2], [0, 0, 0, 1, 1, 2], [0], [0]>} : vector<3x32x32xf32>, vector<3x32x32xf32>, vector<3x32x32xf32> -> vector<3x32x32xf32>
    %c0_17 = arith.constant 0 : index
    %c0_18 = arith.constant 0 : index
    %c0_19 = arith.constant 0 : index
    %29 = vector.load %arg3[%c0_17, %c0_18, %c0_19] : memref<3x32x32xf32, #tpu.memory_space<vmem>>, vector<3x32x32xf32>
    tpu.vector_store %arg3[%c0_17, %c0_18, %c0_19], %28 {strides = array<i32>} : memref<3x32x32xf32, #tpu.memory_space<vmem>>, vector<3x32x32xf32>,
    return
  }
}

</mosaic_0001>

<llo_original>
// kernel: model_forward.1
$region0: #{model_forward.1}
  #allocation0 [shape = 'u32[]', space=smem, size = 0x4, offset = 0x4, fixed_abs, tag = 'smem constant byte address 0x4 - core index']
  #allocation1 [shape = 'u32[144,128]{1,0:T(1,128)}', space=vmem, size = 0x12000, scoped, tag = 'internal scratch']
  %s0 = inlined_call_operand.vmem [shape: f32[128,32], index: 0, kind: input, shape index: {}]
  %s1 = inlined_call_operand.vmem [shape: f32[3,32,32], index: 1, kind: input, shape index: {}]
  %s2 = inlined_call_operand.vmem [shape: f32[3,32,32], index: 2, kind: input, shape index: {}]
  %s3 = inlined_call_operand.hbm [shape: f32[3,32,32], index: 3, kind: output, shape index: {}]
  %s4 = sld [smem:[#allocation0]]
  $region22: #{model_forward.1} parent=0
    _
  %s6 = ssub.s32 1, %s4
  %s7 = scalar_select 0, %s6, %s4
  $region1: #{model_forward.1} parent=0
    #allocation2 [shape = 'u8[49152]{0}', space=vmem, size = 0xc000, scoped, tag = 'output window, operand 0, single buffered']
    #allocation3 [shape = 's32[1]{0}', space=sflag, size = 0x4, scoped, tag = 'scoped memory for model_forward.1']
    %8 = vsyncpa [#allocation3], 0
    // Predicated region
    $region2: #{model_forward.1} parent=1 // pred_check
      _
    $region3: #{model_forward.1} parent=1 // pred_check_branch
      %10 = sbr.rel (0) target = $region5
    $region4: #{model_forward.1} parent=1 // pred_region
      _
    $region5: #{model_forward.1} parent=1 // pred_fallthru
      _
    // Predicated region
    $region6: #{model_forward.1} parent=1 // pred_check
      _
    $region7: #{model_forward.1} parent=1 // pred_check_branch
      %12 = sbr.rel (0) target = $region9
    $region8: #{model_forward.1} parent=1 // pred_region
      _
    $region9: #{model_forward.1} parent=1 // pred_fallthru
      _
    // Predicated region
    $region10: #{model_forward.1} parent=1 // pred_check
      _
    $region11: #{model_forward.1} parent=1 // pred_check_branch
      %14 = sbr.rel (0) target = $region13
    $region12: #{model_forward.1} parent=1 // pred_region
      _
    $region13: #{model_forward.1} parent=1 // pred_fallthru
      _
    %v15 = vld [vmem:[%s0] sm:$0xff]
    %v16 = vld [vmem:[%s0 + $0x8] sm:$0xff]
    %v17 = vld [vmem:[%s0 + $0x10] sm:$0xff]
    %v18 = vld [vmem:[%s0 + $0x18] sm:$0xff]
    %v19 = vld [vmem:[%s0 + $0x20] sm:$0xff]
    %v20 = vld [vmem:[%s0 + $0x28] sm:$0xff]
    %v21 = vld [vmem:[%s0 + $0x30] sm:$0xff]
    %v22 = vld [vmem:[%s0 + $0x38] sm:$0xff]
    %v23 = vld [vmem:[%s0 + $0x40] sm:$0xff]
    %v24 = vld [vmem:[%s0 + $0x48] sm:$0xff]
    %v25 = vld [vmem:[%s0 + $0x50] sm:$0xff]
    %v26 = vld [vmem:[%s0 + $0x58] sm:$0xff]
    %v27 = vld [vmem:[%s0 + $0x60] sm:$0xff]
    %v28 = vld [vmem:[%s0 + $0x68] sm:$0xff]
    %v29 = vld [vmem:[%s0 + $0x70] sm:$0xff]
    %v30 = vld [vmem:[%s0 + $0x78] sm:$0xff]
    %v31 = vld [vmem:[%s1] sm:$0xff]
    %v32 = vld [vmem:[%s1 + $0x8] sm:$0xff]
    %v33 = vld [vmem:[%s1 + $0x10] sm:$0xff]
    %v34 = vld [vmem:[%s1 + $0x18] sm:$0xff]
    %vm35 = vcmask 261120
    %v37 = vsel %vm35, %v15, 0
    %v40 = vsel %vm35, %v16, 0
    %v43 = vsel %vm35, %v17, 0
    %v46 = vsel %vm35, %v18, 0
    %48 = vmatprep.subr.mxu0 0.0
    %49 = vmatpush1.msra.mxu0 %v31
    %50 = vmatprep.subr.mxu0 0.0
    %51 = vmatpush1.msra.mxu0 %v32
    %52 = vmatprep.subr.mxu0 0.0
    %53 = vmatpush1.msra.mxu0 %v33
    %54 = vmatprep.subr.mxu0 0.0
    %55 = vmatpush1.msra.mxu0 %v34
    %56 = vmatprep.subr.mxu0 0.0
    %57 = vmatpush1.msra.mxu0 0.0
    %58 = vmatprep.subr.mxu0 0.0
    %59 = vmatpush1.msra.mxu0 0.0
    %60 = vmatprep.subr.mxu0 0.0
    %61 = vmatpush1.msra.mxu0 0.0
    %62 = vmatprep.subr.mxu0 0.0
    %63 = vmatpush1.msra.mxu0 0.0
    %64 = vmatprep.subr.mxu0 0.0
    %65 = vmatpush1.msra.mxu0 0.0
    %66 = vmatprep.subr.mxu0 0.0
    %67 = vmatpush1.msra.mxu0 0.0
    %68 = vmatprep.subr.mxu0 0.0
    %69 = vmatpush1.msra.mxu0 0.0
    %70 = vmatprep.subr.mxu0 0.0
    %71 = vmatpush1.msra.mxu0 0.0
    %72 = vmatprep.subr.mxu0 0.0
    %73 = vmatpush1.msra.mxu0 0.0
    %74 = vmatprep.subr.mxu0 0.0
    %75 = vmatpush1.msra.mxu0 0.0
    %76 = vmatprep.subr.mxu0 0.0
    %77 = vmatpush1.msra.mxu0 0.0
    %78 = vmatprep.subr.mxu0 0.0
    %79 = vmatpush1.msra.mxu0 0.0
    %80 = vmatprep.subr.mxu0 0.0
    %81 = vmatpush1.msra.mxu0 0.0
    %82 = vmatprep.subr.mxu0 0.0
    %83 = vmatpush1.msra.mxu0 0.0
    %84 = vmatprep.subr.mxu0 0.0
    %85 = vmatpush1.msra.mxu0 0.0
    %86 = vmatprep.subr.mxu0 0.0
    %87 = vmatpush1.msra.mxu0 0.0
    %88 = vmatprep.subr.mxu0 0.0
    %89 = vmatpush1.msra.mxu0 0.0
    %90 = vmatprep.subr.mxu0 0.0
    %91 = vmatpush1.msra.mxu0 0.0
    %92 = vmatprep.subr.mxu0 0.0
    %93 = vmatpush1.msra.mxu0 0.0
    %94 = vmatprep.subr.mxu0 0.0
    %95 = vmatpush1.msra.mxu0 0.0
    %96 = vmatprep.subr.mxu0 0.0
    %97 = vmatpush1.msra.mxu0 0.0
    %98 = vmatprep.subr.mxu0 0.0
    %99 = vmatpush1.msra.mxu0 0.0
    %100 = vmatprep.subr.mxu0 0.0
    %101 = vmatpush1.msra.mxu0 0.0
    %102 = vmatprep.subr.mxu0 0.0
    %103 = vmatpush1.msra.mxu0 0.0
    %104 = vmatprep.subr.mxu0 0.0
    %105 = vmatpush1.msra.mxu0 0.0
    %106 = vmatprep.subr.mxu0 0.0
    %107 = vmatpush1.msra.mxu0 0.0
    %108 = vmatprep.subr.mxu0 0.0
    %109 = vmatpush1.msra.mxu0 0.0
    %110 = vmatprep.subr.mxu0 0.0
    %111 = vmatpush1.msra.mxu0 0.0
    %112 = vmatprep.mubr.f32.mxu0 0.0
    %113 = vmatmul.mubr.f32.gmra.mrb[0].mxu0 %v37
    %v114 = vpop.f32.mrb[0].mxu0
    %v115 = vadd.f32 0.0, %v114
    %v116 = vpop.f32.mrb[0].mxu0
    %117 = vmatprep.mubr.f32.mxu0 0.0
    %118 = vmatmul.mubr.f32.gmra.mrb[0].mxu0 %v40
    %v119 = vpop.f32.mrb[0].mxu0
    %v120 = vadd.f32 0.0, %v119
    %v121 = vpop.f32.mrb[0].mxu0
    %122 = vmatprep.mubr.f32.mxu0 0.0
    %123 = vmatmul.mubr.f32.gmra.mrb[0].mxu0 %v43
    %v124 = vpop.f32.mrb[0].mxu0
    %v125 = vadd.f32 0.0, %v124
    %v126 = vpop.f32.mrb[0].mxu0
    %127 = vmatprep.mubr.f32.mxu0 0.0
    %128 = vmatmul.mubr.f32.gmra.mrb[0].mxu0 %v46
    %v129 = vpop.f32.mrb[0].mxu0
    %v130 = vadd.f32 0.0, %v129
    %v131 = vpop.f32.mrb[0].mxu0
    %132 = vdwg.mxu0
    %s133 = scalar_lea.vmem %s1, 32
    %v134 = vld [vmem:[%s133] sm:$0xff]
    %v135 = vld [vmem:[%s133 + $0x8] sm:$0xff]
    %v136 = vld [vmem:[%s133 + $0x10] sm:$0xff]
    %v137 = vld [vmem:[%s133 + $0x18] sm:$0xff]
    %v139 = vsel %vm35, %v19, 0
    %v142 = vsel %vm35, %v20, 0
    %v145 = vsel %vm35, %v21, 0
    %v148 = vsel %vm35, %v22, 0
    %v151 = vsel %vm35, %v23, 0
    %v154 = vsel %vm35, %v24, 0
    %v157 = vsel %vm35, %v25, 0
    %v160 = vsel %vm35, %v26, 0
    %v163 = vsel %vm35, %v27, 0
    %v166 = vsel %vm35, %v28, 0
    %v169 = vsel %vm35, %v29, 0
    %v172 = vsel %vm35, %v30, 0
    %174 = vmatprep.subr.mxu0 0.0
    %175 = vmatpush1.msra.mxu0 %v134
    %176 = vmatprep.subr.mxu0 0.0
    %177 = vmatpush1.msra.mxu0 %v135
    %178 = vmatprep.subr.mxu0 0.0
    %179 = vmatpush1.msra.mxu0 %v136
    %180 = vmatprep.subr.mxu0 0.0
    %181 = vmatpush1.msra.mxu0 %v137
    %182 = vmatprep.subr.mxu0 0.0
    %183 = vmatpush1.msra.mxu0 0.0
    %184 = vmatprep.subr.mxu0 0.0
    %185 = vmatpush1.msra.mxu0 0.0
    %186 = vmatprep.subr.mxu0 0.0
    %187 = vmatpush1.msra.mxu0 0.0
    %188 = vmatprep.subr.mxu0 0.0
    %189 = vmatpush1.msra.mxu0 0.0
    %190 = vmatprep.subr.mxu0 0.0
    %191 = vmatpush1.msra.mxu0 0.0
    %192 = vmatprep.subr.mxu0 0.0
    %193 = vmatpush1.msra.mxu0 0.0
    %194 = vmatprep.subr.mxu0 0.0
    %195 = vmatpush1.msra.mxu0 0.0
    %196 = vmatprep.subr.mxu0 0.0
    %197 = vmatpush1.msra.mxu0 0.0
    %198 = vmatprep.subr.mxu0 0.0
    %199 = vmatpush1.msra.mxu0 0.0
    %200 = vmatprep.subr.mxu0 0.0
    %201 = vmatpush1.msra.mxu0 0.0
    %202 = vmatprep.subr.mxu0 0.0
    %203 = vmatpush1.msra.mxu0 0.0
    %204 = vmatprep.subr.mxu0 0.0
    %205 = vmatpush1.msra.mxu0 0.0
    %206 = vmatprep.subr.mxu0 0.0
    %207 = vmatpush1.msra.mxu0 0.0
    %208 = vmatprep.subr.mxu0 0.0
    %209 = vmatpush1.msra.mxu0 0.0
    %210 = vmatprep.subr.mxu0 0.0
    %211 = vmatpush1.msra.mxu0 0.0
    %212 = vmatprep.subr.mxu0 0.0
    %213 = vmatpush1.msra.mxu0 0.0
    %214 = vmatprep.subr.mxu0 0.0
    %215 = vmatpush1.msra.mxu0 0.0
    %216 = vmatprep.subr.mxu0 0.0
    %217 = vmatpush1.msra.mxu0 0.0
    %218 = vmatprep.subr.mxu0 0.0
    %219 = vmatpush1.msra.mxu0 0.0
    %220 = vmatprep.subr.mxu0 0.0
    %221 = vmatpush1.msra.mxu0 0.0
    %222 = vmatprep.subr.mxu0 0.0
    %223 = vmatpush1.msra.mxu0 0.0
    %224 = vmatprep.subr.mxu0 0.0
    %225 = vmatpush1.msra.mxu0 0.0
    %226 = vmatprep.subr.mxu0 0.0
    %227 = vmatpush1.msra.mxu0 0.0
    %228 = vmatprep.subr.mxu0 0.0
    %229 = vmatpush1.msra.mxu0 0.0
    %230 = vmatprep.subr.mxu0 0.0
    %231 = vmatpush1.msra.mxu0 0.0
    %232 = vmatprep.subr.mxu0 0.0
    %233 = vmatpush1.msra.mxu0 0.0
    %234 = vmatprep.subr.mxu0 0.0
    %235 = vmatpush1.msra.mxu0 0.0
    %236 = vmatprep.subr.mxu0 0.0
    %237 = vmatpush1.msra.mxu0 0.0
    %238 = vmatprep.mubr.f32.mxu0 0.0
    %239 = vmatmul.mubr.f32.gmra.mrb[0].mxu0 %v139
    %v240 = vpop.f32.mrb[0].mxu0
    %v241 = vadd.f32 0.0, %v240
    %v242 = vpop.f32.mrb[0].mxu0
    %243 = vmatprep.mubr.f32.mxu0 0.0
    %244 = vmatmul.mubr.f32.gmra.mrb[0].mxu0 %v142
    %v245 = vpop.f32.mrb[0].mxu0
    %v246 = vadd.f32 0.0, %v245
    %v247 = vpop.f32.mrb[0].mxu0
    %248 = vmatprep.mubr.f32.mxu0 0.0
    %249 = vmatmul.mubr.f32.gmra.mrb[0].mxu0 %v145
    %v250 = vpop.f32.mrb[0].mxu0
    %v251 = vadd.f32 0.0, %v250
    %v252 = vpop.f32.mrb[0].mxu0
    %253 = vmatprep.mubr.f32.mxu0 0.0
    %254 = vmatmul.mubr.f32.gmra.mrb[0].mxu0 %v148
    %v255 = vpop.f32.mrb[0].mxu0
    %v256 = vadd.f32 0.0, %v255
    %v257 = vpop.f32.mrb[0].mxu0
    %258 = vmatprep.mubr.f32.mxu0 0.0
    %259 = vmatmul.mubr.f32.gmra.mrb[0].mxu0 %v151
    %v260 = vpop.f32.mrb[0].mxu0
    %v261 = vadd.f32 0.0, %v260
    %v262 = vpop.f32.mrb[0].mxu0
    %263 = vmatprep.mubr.f32.mxu0 0.0
    %264 = vmatmul.mubr.f32.gmra.mrb[0].mxu0 %v154
    %v265 = vpop.f32.mrb[0].mxu0
    %v266 = vadd.f32 0.0, %v265
    %v267 = vpop.f32.mrb[0].mxu0
    %268 = vmatprep.mubr.f32.mxu0 0.0
    %269 = vmatmul.mubr.f32.gmra.mrb[0].mxu0 %v157
    %v270 = vpop.f32.mrb[0].mxu0
    %v271 = vadd.f32 0.0, %v270
    %v272 = vpop.f32.mrb[0].mxu0
    %273 = vmatprep.mubr.f32.mxu0 0.0
    %274 = vmatmul.mubr.f32.gmra.mrb[0].mxu0 %v160
    %v275 = vpop.f32.mrb[0].mxu0
    %v276 = vadd.f32 0.0, %v275
    %v277 = vpop.f32.mrb[0].mxu0
    %278 = vmatprep.mubr.f32.mxu0 0.0
    %279 = vmatmul.mubr.f32.gmra.mrb[0].mxu0 %v163
    %v280 = vpop.f32.mrb[0].mxu0
    %v281 = vadd.f32 0.0, %v280
    %v282 = vpop.f32.mrb[0].mxu0
    %283 = vmatprep.mubr.f32.mxu0 0.0
    %284 = vmatmul.mubr.f32.gmra.mrb[0].mxu0 %v166
    %v285 = vpop.f32.mrb[0].mxu0
    %v286 = vadd.f32 0.0, %v285
    %v287 = vpop.f32.mrb[0].mxu0
    %288 = vmatprep.mubr.f32.mxu0 0.0
    %289 = vmatmul.mubr.f32.gmra.mrb[0].mxu0 %v169
    %v290 = vpop.f32.mrb[0].mxu0
    %v291 = vadd.f32 0.0, %v290
    %v292 = vpop.f32.mrb[0].mxu0
    %293 = vmatprep.mubr.f32.mxu0 0.0
    %294 = vmatmul.mubr.f32.gmra.mrb[0].mxu0 %v172
    %v295 = vpop.f32.mrb[0].mxu0
    %v296 = vadd.f32 0.0, %v295
    %v297 = vpop.f32.mrb[0].mxu0
    %298 = vdwg.mxu0
    %s299 = scalar_lea.vmem %s1, 64
    %v300 = vld [vmem:[%s299] sm:$0xff]
    %v301 = vld [vmem:[%s299 + $0x8] sm:$0xff]
    %v302 = vld [vmem:[%s299 + $0x10] sm:$0xff]
    %v303 = vld [vmem:[%s299 + $0x18] sm:$0xff]
    %304 = vmatprep.subr.mxu0 0.0
    %305 = vmatpush1.msra.mxu0 %v300
    %306 = vmatprep.subr.mxu0 0.0
    %307 = vmatpush1.msra.mxu0 %v301
    %308 = vmatprep.subr.mxu0 0.0
    %309 = vmatpush1.msra.mxu0 %v302
    %310 = vmatprep.subr.mxu0 0.0
    %311 = vmatpush1.msra.mxu0 %v303
    %312 = vmatprep.subr.mxu0 0.0
    %313 = vmatpush1.msra.mxu0 0.0
    %314 = vmatprep.subr.mxu0 0.0
    %315 = vmatpush1.msra.mxu0 0.0
    %316 = vmatprep.subr.mxu0 0.0
    %317 = vmatpush1.msra.mxu0 0.0
    %318 = vmatprep.subr.mxu0 0.0
    %319 = vmatpush1.msra.mxu0 0.0
    %320 = vmatprep.subr.mxu0 0.0
    %321 = vmatpush1.msra.mxu0 0.0
    %322 = vmatprep.subr.mxu0 0.0
    %323 = vmatpush1.msra.mxu0 0.0
    %324 = vmatprep.subr.mxu0 0.0
    %325 = vmatpush1.msra.mxu0 0.0
    %326 = vmatprep.subr.mxu0 0.0
    %327 = vmatpush1.msra.mxu0 0.0
    %328 = vmatprep.subr.mxu0 0.0
    %329 = vmatpush1.msra.mxu0 0.0
    %330 = vmatprep.subr.mxu0 0.0
    %331 = vmatpush1.msra.mxu0 0.0
    %332 = vmatprep.subr.mxu0 0.0
    %333 = vmatpush1.msra.mxu0 0.0
    %334 = vmatprep.subr.mxu0 0.0
    %335 = vmatpush1.msra.mxu0 0.0
    %336 = vmatprep.subr.mxu0 0.0
    %337 = vmatpush1.msra.mxu0 0.0
    %338 = vmatprep.subr.mxu0 0.0
    %339 = vmatpush1.msra.mxu0 0.0
    %340 = vmatprep.subr.mxu0 0.0
    %341 = vmatpush1.msra.mxu0 0.0
    %342 = vmatprep.subr.mxu0 0.0
    %343 = vmatpush1.msra.mxu0 0.0
    %344 = vmatprep.subr.mxu0 0.0
    %345 = vmatpush1.msra.mxu0 0.0
    %346 = vmatprep.subr.mxu0 0.0
    %347 = vmatpush1.msra.mxu0 0.0
    %348 = vmatprep.subr.mxu0 0.0
    %349 = vmatpush1.msra.mxu0 0.0
    %350 = vmatprep.subr.mxu0 0.0
    %351 = vmatpush1.msra.mxu0 0.0
    %352 = vmatprep.subr.mxu0 0.0
    %353 = vmatpush1.msra.mxu0 0.0
    %354 = vmatprep.subr.mxu0 0.0
    %355 = vmatpush1.msra.mxu0 0.0
    %356 = vmatprep.subr.mxu0 0.0
    %357 = vmatpush1.msra.mxu0 0.0
    %358 = vmatprep.subr.mxu0 0.0
    %359 = vmatpush1.msra.mxu0 0.0
    %360 = vmatprep.subr.mxu0 0.0
    %361 = vmatpush1.msra.mxu0 0.0
    %362 = vmatprep.subr.mxu0 0.0
    %363 = vmatpush1.msra.mxu0 0.0
    %364 = vmatprep.subr.mxu0 0.0
    %365 = vmatpush1.msra.mxu0 0.0
    %366 = vmatprep.subr.mxu0 0.0
    %367 = vmatpush1.msra.mxu0 0.0
    %368 = vmatprep.mubr.f32.mxu0 0.0
    %369 = vmatmul.mubr.f32.gmra.mrb[0].mxu0 %v139
    %v370 = vpop.f32.mrb[0].mxu0
    %v371 = vadd.f32 0.0, %v370
    %v372 = vpop.f32.mrb[0].mxu0
    %373 = vmatprep.mubr.f32.mxu0 0.0
    %374 = vmatmul.mubr.f32.gmra.mrb[0].mxu0 %v142
    %v375 = vpop.f32.mrb[0].mxu0
    %v376 = vadd.f32 0.0, %v375
    %v377 = vpop.f32.mrb[0].mxu0
    %378 = vmatprep.mubr.f32.mxu0 0.0
    %379 = vmatmul.mubr.f32.gmra.mrb[0].mxu0 %v145
    %v380 = vpop.f32.mrb[0].mxu0
    %v381 = vadd.f32 0.0, %v380
    %v382 = vpop.f32.mrb[0].mxu0
    %383 = vmatprep.mubr.f32.mxu0 0.0
    %384 = vmatmul.mubr.f32.gmra.mrb[0].mxu0 %v148
    %v385 = vpop.f32.mrb[0].mxu0
    %v386 = vadd.f32 0.0, %v385
    %v387 = vpop.f32.mrb[0].mxu0
    %388 = vmatprep.mubr.f32.mxu0 0.0
    %389 = vmatmul.mubr.f32.gmra.mrb[0].mxu0 %v151
    %v390 = vpop.f32.mrb[0].mxu0
    %v391 = vadd.f32 0.0, %v390
    %v392 = vpop.f32.mrb[0].mxu0
    %393 = vmatprep.mubr.f32.mxu0 0.0
    %394 = vmatmul.mubr.f32.gmra.mrb[0].mxu0 %v154
    %v395 = vpop.f32.mrb[0].mxu0
    %v396 = vadd.f32 0.0, %v395
    %v397 = vpop.f32.mrb[0].mxu0
    %398 = vmatprep.mubr.f32.mxu0 0.0
    %399 = vmatmul.mubr.f32.gmra.mrb[0].mxu0 %v157
    %v400 = vpop.f32.mrb[0].mxu0
    %v401 = vadd.f32 0.0, %v400
    %v402 = vpop.f32.mrb[0].mxu0
    %403 = vmatprep.mubr.f32.mxu0 0.0
    %404 = vmatmul.mubr.f32.gmra.mrb[0].mxu0 %v160
    %v405 = vpop.f32.mrb[0].mxu0
    %v406 = vadd.f32 0.0, %v405
    %v407 = vpop.f32.mrb[0].mxu0
    %408 = vmatprep.mubr.f32.mxu0 0.0
    %409 = vmatmul.mubr.f32.gmra.mrb[0].mxu0 %v163
    %v410 = vpop.f32.mrb[0].mxu0
    %v411 = vadd.f32 0.0, %v410
    %v412 = vpop.f32.mrb[0].mxu0
    %413 = vmatprep.mubr.f32.mxu0 0.0
    %414 = vmatmul.mubr.f32.gmra.mrb[0].mxu0 %v166
    %v415 = vpop.f32.mrb[0].mxu0
    %v416 = vadd.f32 0.0, %v415
    %v417 = vpop.f32.mrb[0].mxu0
    %418 = vmatprep.mubr.f32.mxu0 0.0
    %419 = vmatmul.mubr.f32.gmra.mrb[0].mxu0 %v169
    %v420 = vpop.f32.mrb[0].mxu0
    %v421 = vadd.f32 0.0, %v420
    %v422 = vpop.f32.mrb[0].mxu0
    %423 = vmatprep.mubr.f32.mxu0 0.0
    %424 = vmatmul.mubr.f32.gmra.mrb[0].mxu0 %v172
    %v425 = vpop.f32.mrb[0].mxu0
    %v426 = vadd.f32 0.0, %v425
    %v427 = vpop.f32.mrb[0].mxu0
    %428 = vdwg.mxu0
    %v430 = vsel %vm35, %v241, 0
    %v433 = vsel %vm35, %v246, 0
    %v436 = vsel %vm35, %v251, 0
    %v439 = vsel %vm35, %v256, 0
    %v442 = vsel %vm35, %v261, 0
    %v445 = vsel %vm35, %v266, 0
    %v448 = vsel %vm35, %v271, 0
    %v451 = vsel %vm35, %v276, 0
    %v454 = vsel %vm35, %v281, 0
    %v457 = vsel %vm35, %v286, 0
    %v460 = vsel %vm35, %v291, 0
    %v463 = vsel %vm35, %v296, 0
    %v466 = vsel %vm35, %v115, 0
    %v469 = vsel %vm35, %v120, 0
    %v472 = vsel %vm35, %v125, 0
    %v475 = vsel %vm35, %v130, 0
    %477 = vmatprep.subr.mxu0 0.0
    %478 = vmatpush1.xpose.msra.mxu0 %v466
    %479 = vmatprep.subr.mxu0 0.0
    %480 = vmatpush1.xpose.msra.mxu0 %v469
    %481 = vmatprep.subr.mxu0 0.0
    %482 = vmatpush1.xpose.msra.mxu0 %v472
    %483 = vmatprep.subr.mxu0 0.0
    %484 = vmatpush1.xpose.msra.mxu0 %v475
    %485 = vmatprep.subr.mxu0 0.0
    %486 = vmatpush1.xpose.msra.mxu0 0.0
    %487 = vmatprep.subr.mxu0 0.0
    %488 = vmatpush1.xpose.msra.mxu0 0.0
    %489 = vmatprep.subr.mxu0 0.0
    %490 = vmatpush1.xpose.msra.mxu0 0.0
    %491 = vmatprep.subr.mxu0 0.0
    %492 = vmatpush1.xpose.msra.mxu0 0.0
    %493 = vmatprep.subr.mxu0 0.0
    %494 = vmatpush1.xpose.msra.mxu0 0.0
    %495 = vmatprep.subr.mxu0 0.0
    %496 = vmatpush1.xpose.msra.mxu0 0.0
    %497 = vmatprep.subr.mxu0 0.0
    %498 = vmatpush1.xpose.msra.mxu0 0.0
    %499 = vmatprep.subr.mxu0 0.0
    %500 = vmatpush1.xpose.msra.mxu0 0.0
    %501 = vmatprep.subr.mxu0 0.0
    %502 = vmatpush1.xpose.msra.mxu0 0.0
    %503 = vmatprep.subr.mxu0 0.0
    %504 = vmatpush1.xpose.msra.mxu0 0.0
    %505 = vmatprep.subr.mxu0 0.0
    %506 = vmatpush1.xpose.msra.mxu0 0.0
    %507 = vmatprep.subr.mxu0 0.0
    %508 = vmatpush1.xpose.msra.mxu0 0.0
    %509 = vmatprep.subr.mxu0 0.0
    %510 = vmatpush1.xpose.msra.mxu0 0.0
    %511 = vmatprep.subr.mxu0 0.0
    %512 = vmatpush1.xpose.msra.mxu0 0.0
    %513 = vmatprep.subr.mxu0 0.0
    %514 = vmatpush1.xpose.msra.mxu0 0.0
    %515 = vmatprep.subr.mxu0 0.0
    %516 = vmatpush1.xpose.msra.mxu0 0.0
    %517 = vmatprep.subr.mxu0 0.0
    %518 = vmatpush1.xpose.msra.mxu0 0.0
    %519 = vmatprep.subr.mxu0 0.0
    %520 = vmatpush1.xpose.msra.mxu0 0.0
    %521 = vmatprep.subr.mxu0 0.0
    %522 = vmatpush1.xpose.msra.mxu0 0.0
    %523 = vmatprep.subr.mxu0 0.0
    %524 = vmatpush1.xpose.msra.mxu0 0.0
    %525 = vmatprep.subr.mxu0 0.0
    %526 = vmatpush1.xpose.msra.mxu0 0.0
    %527 = vmatprep.subr.mxu0 0.0
    %528 = vmatpush1.xpose.msra.mxu0 0.0
    %529 = vmatprep.subr.mxu0 0.0
    %530 = vmatpush1.xpose.msra.mxu0 0.0
    %531 = vmatprep.subr.mxu0 0.0
    %532 = vmatpush1.xpose.msra.mxu0 0.0
    %533 = vmatprep.subr.mxu0 0.0
    %534 = vmatpush1.xpose.msra.mxu0 0.0
    %535 = vmatprep.subr.mxu0 0.0
    %536 = vmatpush1.xpose.msra.mxu0 0.0
    %537 = vmatprep.subr.mxu0 0.0
    %538 = vmatpush1.xpose.msra.mxu0 0.0
    %539 = vmatprep.subr.mxu0 0.0
    %540 = vmatpush1.xpose.msra.mxu0 0.0
    %541 = vmatprep.mubr.f32.mxu0 0.0
    %542 = vmatmul.mubr.f32.gmra.mrb[0].mxu0 %v430
    %v543 = vpop.f32.mrb[0].mxu0
    %v544 = vadd.f32 0.0, %v543
    %v545 = vpop.f32.mrb[0].mxu0
    %546 = vmatprep.mubr.f32.mxu0 0.0
    %547 = vmatmul.mubr.f32.gmra.mrb[0].mxu0 %v433
    %v548 = vpop.f32.mrb[0].mxu0
    %v549 = vadd.f32 0.0, %v548
    %v550 = vpop.f32.mrb[0].mxu0
    %551 = vmatprep.mubr.f32.mxu0 0.0
    %552 = vmatmul.mubr.f32.gmra.mrb[0].mxu0 %v436
    %v553 = vpop.f32.mrb[0].mxu0
    %v554 = vadd.f32 0.0, %v553
    %v555 = vpop.f32.mrb[0].mxu0
    %556 = vmatprep.mubr.f32.mxu0 0.0
    %557 = vmatmul.mubr.f32.gmra.mrb[0].mxu0 %v439
    %v558 = vpop.f32.mrb[0].mxu0
    %v559 = vadd.f32 0.0, %v558
    %v560 = vpop.f32.mrb[0].mxu0
    %561 = vmatprep.mubr.f32.mxu0 0.0
    %562 = vmatmul.mubr.f32.gmra.mrb[0].mxu0 %v442
    %v563 = vpop.f32.mrb[0].mxu0
    %v564 = vadd.f32 0.0, %v563
    %v565 = vpop.f32.mrb[0].mxu0
    %566 = vmatprep.mubr.f32.mxu0 0.0
    %567 = vmatmul.mubr.f32.gmra.mrb[0].mxu0 %v445
    %v568 = vpop.f32.mrb[0].mxu0
    %v569 = vadd.f32 0.0, %v568
    %v570 = vpop.f32.mrb[0].mxu0
    %571 = vmatprep.mubr.f32.mxu0 0.0
    %572 = vmatmul.mubr.f32.gmra.mrb[0].mxu0 %v448
    %v573 = vpop.f32.mrb[0].mxu0
    %v574 = vadd.f32 0.0, %v573
    %v575 = vpop.f32.mrb[0].mxu0
    %576 = vmatprep.mubr.f32.mxu0 0.0
    %577 = vmatmul.mubr.f32.gmra.mrb[0].mxu0 %v451
    %v578 = vpop.f32.mrb[0].mxu0
    %v579 = vadd.f32 0.0, %v578
    %v580 = vpop.f32.mrb[0].mxu0
    %581 = vmatprep.mubr.f32.mxu0 0.0
    %582 = vmatmul.mubr.f32.gmra.mrb[0].mxu0 %v454
    %v583 = vpop.f32.mrb[0].mxu0
    %v584 = vadd.f32 0.0, %v583
    %v585 = vpop.f32.mrb[0].mxu0
    %586 = vmatprep.mubr.f32.mxu0 0.0
    %587 = vmatmul.mubr.f32.gmra.mrb[0].mxu0 %v457
    %v588 = vpop.f32.mrb[0].mxu0
    %v589 = vadd.f32 0.0, %v588
    %v590 = vpop.f32.mrb[0].mxu0
    %591 = vmatprep.mubr.f32.mxu0 0.0
    %592 = vmatmul.mubr.f32.gmra.mrb[0].mxu0 %v460
    %v593 = vpop.f32.mrb[0].mxu0
    %v594 = vadd.f32 0.0, %v593
    %v595 = vpop.f32.mrb[0].mxu0
    %596 = vmatprep.mubr.f32.mxu0 0.0
    %597 = vmatmul.mubr.f32.gmra.mrb[0].mxu0 %v463
    %v598 = vpop.f32.mrb[0].mxu0
    %v599 = vadd.f32 0.0, %v598
    %v600 = vpop.f32.mrb[0].mxu0
    %601 = vdwg.mxu0
    %602 = vxpose.xlu0.b32.start [1/16] %v544, 128
    %603 = vxpose.xlu0.b32.cont [2/16] %v549, 128
    %604 = vxpose.xlu0.b32.cont [3/16] %v554, 128
    %605 = vxpose.xlu0.b32.cont [4/16] %v559, 128
    %606 = vxpose.xlu0.b32.cont [5/16] 0.0, 128
    %607 = vxpose.xlu0.b32.cont [6/16] 0.0, 128
    %608 = vxpose.xlu0.b32.cont [7/16] 0.0, 128
    %609 = vxpose.xlu0.b32.cont [8/16] 0.0, 128
    %610 = vxpose.xlu0.b32.cont [9/16] 0.0, 128
    %611 = vxpose.xlu0.b32.cont [10/16] 0.0, 128
    %612 = vxpose.xlu0.b32.cont [11/16] 0.0, 128
    %613 = vxpose.xlu0.b32.cont [12/16] 0.0, 128
    %614 = vxpose.xlu0.b32.cont [13/16] 0.0, 128
    %615 = vxpose.xlu0.b32.cont [14/16] 0.0, 128
    %616 = vxpose.xlu0.b32.cont [15/16] 0.0, 128
    %617 = vxpose.xlu0.b32.end [16/16] 0.0, 128
    %v618 = vpop.trf.xlu0
    %v619 = vpop.trf.xlu0
    %v620 = vpop.trf.xlu0
    %v621 = vpop.trf.xlu0
    %v622 = vpop.trf.xlu0
    %v623 = vpop.trf.xlu0
    %v624 = vpop.trf.xlu0
    %v625 = vpop.trf.xlu0
    %v626 = vpop.trf.xlu0
    %v627 = vpop.trf.xlu0
    %v628 = vpop.trf.xlu0
    %v629 = vpop.trf.xlu0
    %v630 = vpop.trf.xlu0
    %v631 = vpop.trf.xlu0
    %v632 = vpop.trf.xlu0
    %v633 = vpop.trf.xlu0
    %634 = vxpose.xlu0.b32.start [1/16] %v564, 128
    %635 = vxpose.xlu0.b32.cont [2/16] %v569, 128
    %636 = vxpose.xlu0.b32.cont [3/16] %v574, 128
    %637 = vxpose.xlu0.b32.cont [4/16] %v579, 128
    %638 = vxpose.xlu0.b32.cont [5/16] 0.0, 128
    %639 = vxpose.xlu0.b32.cont [6/16] 0.0, 128
    %640 = vxpose.xlu0.b32.cont [7/16] 0.0, 128
    %641 = vxpose.xlu0.b32.cont [8/16] 0.0, 128
    %642 = vxpose.xlu0.b32.cont [9/16] 0.0, 128
    %643 = vxpose.xlu0.b32.cont [10/16] 0.0, 128
    %644 = vxpose.xlu0.b32.cont [11/16] 0.0, 128
    %645 = vxpose.xlu0.b32.cont [12/16] 0.0, 128
    %646 = vxpose.xlu0.b32.cont [13/16] 0.0, 128
    %647 = vxpose.xlu0.b32.cont [14/16] 0.0, 128
    %648 = vxpose.xlu0.b32.cont [15/16] 0.0, 128
    %649 = vxpose.xlu0.b32.end [16/16] 0.0, 128
    %v650 = vpop.trf.xlu0
    %v651 = vpop.trf.xlu0
    %v652 = vpop.trf.xlu0
    %v653 = vpop.trf.xlu0
    %v654 = vpop.trf.xlu0
    %v655 = vpop.trf.xlu0
    %v656 = vpop.trf.xlu0
    %v657 = vpop.trf.xlu0
    %v658 = vpop.trf.xlu0
    %v659 = vpop.trf.xlu0
    %v660 = vpop.trf.xlu0
    %v661 = vpop.trf.xlu0
    %v662 = vpop.trf.xlu0
    %v663 = vpop.trf.xlu0
    %v664 = vpop.trf.xlu0
    %v665 = vpop.trf.xlu0
    %666 = vxpose.xlu0.b32.start [1/16] %v584, 128
    %667 = vxpose.xlu0.b32.cont [2/16] %v589, 128
    %668 = vxpose.xlu0.b32.cont [3/16] %v594, 128
    %669 = vxpose.xlu0.b32.cont [4/16] %v599, 128
    %670 = vxpose.xlu0.b32.cont [5/16] 0.0, 128
    %671 = vxpose.xlu0.b32.cont [6/16] 0.0, 128
    %672 = vxpose.xlu0.b32.cont [7/16] 0.0, 128
    %673 = vxpose.xlu0.b32.cont [8/16] 0.0, 128
    %674 = vxpose.xlu0.b32.cont [9/16] 0.0, 128
    %675 = vxpose.xlu0.b32.cont [10/16] 0.0, 128
    %676 = vxpose.xlu0.b32.cont [11/16] 0.0, 128
    %677 = vxpose.xlu0.b32.cont [12/16] 0.0, 128
    %678 = vxpose.xlu0.b32.cont [13/16] 0.0, 128
    %679 = vxpose.xlu0.b32.cont [14/16] 0.0, 128
    %680 = vxpose.xlu0.b32.cont [15/16] 0.0, 128
    %681 = vxpose.xlu0.b32.end [16/16] 0.0, 128
    %v682 = vpop.trf.xlu0
    %v683 = vpop.trf.xlu0
    %v684 = vpop.trf.xlu0
    %v685 = vpop.trf.xlu0
    %v686 = vpop.trf.xlu0
    %v687 = vpop.trf.xlu0
    %v688 = vpop.trf.xlu0
    %v689 = vpop.trf.xlu0
    %v690 = vpop.trf.xlu0
    %v691 = vpop.trf.xlu0
    %v692 = vpop.trf.xlu0
    %v693 = vpop.trf.xlu0
    %v694 = vpop.trf.xlu0
    %v695 = vpop.trf.xlu0
    %v696 = vpop.trf.xlu0
    %v697 = vpop.trf.xlu0
    %v698 = vld [vmem:[%s2] sm:$0xff]
    %v699 = vld [vmem:[%s2 + $0x8] sm:$0xff]
    %v700 = vld [vmem:[%s2 + $0x10] sm:$0xff]
    %v701 = vld [vmem:[%s2 + $0x18] sm:$0xff]
    %v702 = vld [vmem:[%s2 + $0x20] sm:$0xff]
    %v703 = vld [vmem:[%s2 + $0x28] sm:$0xff]
    %v704 = vld [vmem:[%s2 + $0x30] sm:$0xff]
    %v705 = vld [vmem:[%s2 + $0x38] sm:$0xff]
    %v706 = vld [vmem:[%s2 + $0x40] sm:$0xff]
    %v707 = vld [vmem:[%s2 + $0x48] sm:$0xff]
    %v708 = vld [vmem:[%s2 + $0x50] sm:$0xff]
    %v709 = vld [vmem:[%s2 + $0x58] sm:$0xff]
    %v710 = vadd.f32 %v618, %v698
    %v711 = vadd.f32 %v619, %v699
    %v712 = vadd.f32 %v620, %v700
    %v713 = vadd.f32 %v621, %v701
    %v714 = vadd.f32 %v650, %v702
    %v715 = vadd.f32 %v651, %v703
    %v716 = vadd.f32 %v652, %v704
    %v717 = vadd.f32 %v653, %v705
    %v718 = vadd.f32 %v682, %v706
    %v719 = vadd.f32 %v683, %v707
    %v720 = vadd.f32 %v684, %v708
    %v721 = vadd.f32 %v685, %v709
    %v722 = vsel %vm35, %v710, -inf
    %723 = vmax.xlane.f32.xlu0 %v722
    %v724 = vpop.xlane.xlu0 %723
    %v725 = vsel %vm35, %v711, -inf
    %726 = vmax.xlane.f32.xlu0 %v725
    %v727 = vpop.xlane.xlu0 %726
    %v728 = vsel %vm35, %v712, -inf
    %729 = vmax.xlane.f32.xlu0 %v728
    %v730 = vpop.xlane.xlu0 %729
    %v731 = vsel %vm35, %v713, -inf
    %732 = vmax.xlane.f32.xlu0 %v731
    %v733 = vpop.xlane.xlu0 %732
    %v734 = vsel %vm35, %v714, -inf
    %735 = vmax.xlane.f32.xlu0 %v734
    %v736 = vpop.xlane.xlu0 %735
    %v737 = vsel %vm35, %v715, -inf
    %738 = vmax.xlane.f32.xlu0 %v737
    %v739 = vpop.xlane.xlu0 %738
    %v740 = vsel %vm35, %v716, -inf
    %741 = vmax.xlane.f32.xlu0 %v740
    %v742 = vpop.xlane.xlu0 %741
    %v743 = vsel %vm35, %v717, -inf
    %744 = vmax.xlane.f32.xlu0 %v743
    %v745 = vpop.xlane.xlu0 %744
    %v746 = vsel %vm35, %v718, -inf
    %747 = vmax.xlane.f32.xlu0 %v746
    %v748 = vpop.xlane.xlu0 %747
    %v749 = vsel %vm35, %v719, -inf
    %750 = vmax.xlane.f32.xlu0 %v749
    %v751 = vpop.xlane.xlu0 %750
    %v752 = vsel %vm35, %v720, -inf
    %753 = vmax.xlane.f32.xlu0 %v752
    %v754 = vpop.xlane.xlu0 %753
    %v755 = vsel %vm35, %v721, -inf
    %756 = vmax.xlane.f32.xlu0 %v755
    %v757 = vpop.xlane.xlu0 %756
    %v758 = vsub.f32 %v710, %v724
    %v759 = vsub.f32 %v711, %v727
    %v760 = vsub.f32 %v712, %v730
    %v761 = vsub.f32 %v713, %v733
    %v762 = vsub.f32 %v714, %v736
    %v763 = vsub.f32 %v715, %v739
    %v764 = vsub.f32 %v716, %v742
    %v765 = vsub.f32 %v717, %v745
    %v766 = vsub.f32 %v718, %v748
    %v767 = vsub.f32 %v719, %v751
    %v768 = vsub.f32 %v720, %v754
    %v769 = vsub.f32 %v721, %v757
    %v770 = vmul.f32 %v758, 1.442695
    %v771 = vpow.pop %v770
    %v772 = vmul.f32 %v759, 1.442695
    %v773 = vpow.pop %v772
    %v774 = vmul.f32 %v760, 1.442695
    %v775 = vpow.pop %v774
    %v776 = vmul.f32 %v761, 1.442695
    %v777 = vpow.pop %v776
    %v778 = vmul.f32 %v762, 1.442695
    %v779 = vpow.pop %v778
    %v780 = vmul.f32 %v763, 1.442695
    %v781 = vpow.pop %v780
    %v782 = vmul.f32 %v764, 1.442695
    %v783 = vpow.pop %v782
    %v784 = vmul.f32 %v765, 1.442695
    %v785 = vpow.pop %v784
    %v786 = vmul.f32 %v766, 1.442695
    %v787 = vpow.pop %v786
    %v788 = vmul.f32 %v767, 1.442695
    %v789 = vpow.pop %v788
    %v790 = vmul.f32 %v768, 1.442695
    %v791 = vpow.pop %v790
    %v792 = vmul.f32 %v769, 1.442695
    %v793 = vpow.pop %v792
    %v794 = vsel %vm35, %v771, 0.0
    %795 = vadd.xlane.f32.xlu0 %v794
    %v796 = vpop.xlane.xlu0 %795
    %v797 = vsel %vm35, %v773, 0.0
    %798 = vadd.xlane.f32.xlu0 %v797
    %v799 = vpop.xlane.xlu0 %798
    %v800 = vsel %vm35, %v775, 0.0
    %801 = vadd.xlane.f32.xlu0 %v800
    %v802 = vpop.xlane.xlu0 %801
    %v803 = vsel %vm35, %v777, 0.0
    %804 = vadd.xlane.f32.xlu0 %v803
    %v805 = vpop.xlane.xlu0 %804
    %v806 = vsel %vm35, %v779, 0.0
    %807 = vadd.xlane.f32.xlu0 %v806
    %v808 = vpop.xlane.xlu0 %807
    %v809 = vsel %vm35, %v781, 0.0
    %810 = vadd.xlane.f32.xlu0 %v809
    %v811 = vpop.xlane.xlu0 %810
    %v812 = vsel %vm35, %v783, 0.0
    %813 = vadd.xlane.f32.xlu0 %v812
    %v814 = vpop.xlane.xlu0 %813
    %v815 = vsel %vm35, %v785, 0.0
    %816 = vadd.xlane.f32.xlu0 %v815
    %v817 = vpop.xlane.xlu0 %816
    %v818 = vsel %vm35, %v787, 0.0
    %819 = vadd.xlane.f32.xlu0 %v818
    %v820 = vpop.xlane.xlu0 %819
    %v821 = vsel %vm35, %v789, 0.0
    %822 = vadd.xlane.f32.xlu0 %v821
    %v823 = vpop.xlane.xlu0 %822
    %v824 = vsel %vm35, %v791, 0.0
    %825 = vadd.xlane.f32.xlu0 %v824
    %v826 = vpop.xlane.xlu0 %825
    %v827 = vsel %vm35, %v793, 0.0
    %828 = vadd.xlane.f32.xlu0 %v827
    %v829 = vpop.xlane.xlu0 %828
    %v830 = vrcp.pop %v796
    %v831 = vrcp.pop %v799
    %v832 = vrcp.pop %v802
    %v833 = vrcp.pop %v805
    %v834 = vrcp.pop %v808
    %v835 = vrcp.pop %v811
    %v836 = vrcp.pop %v814
    %v837 = vrcp.pop %v817
    %v838 = vrcp.pop %v820
    %v839 = vrcp.pop %v823
    %v840 = vrcp.pop %v826
    %v841 = vrcp.pop %v829
    %v842 = vmul.f32 %v771, %v830
    %v843 = vmul.f32 %v773, %v831
    %v844 = vmul.f32 %v775, %v832
    %v845 = vmul.f32 %v777, %v833
    %v846 = vmul.f32 %v779, %v834
    %v847 = vmul.f32 %v781, %v835
    %v848 = vmul.f32 %v783, %v836
    %v849 = vmul.f32 %v785, %v837
    %v850 = vmul.f32 %v787, %v838
    %v851 = vmul.f32 %v789, %v839
    %v852 = vmul.f32 %v791, %v840
    %v853 = vmul.f32 %v793, %v841
    %v855 = vsel %vm35, %v842, 0
    %v858 = vsel %vm35, %v843, 0
    %v861 = vsel %vm35, %v844, 0
    %v864 = vsel %vm35, %v845, 0
    %866 = vmatprep.subr.mxu0 0.0
    %867 = vmatpush1.msra.mxu0 %v371
    %868 = vmatprep.subr.mxu0 0.0
    %869 = vmatpush1.msra.mxu0 %v376
    %870 = vmatprep.subr.mxu0 0.0
    %871 = vmatpush1.msra.mxu0 %v381
    %872 = vmatprep.subr.mxu0 0.0
    %873 = vmatpush1.msra.mxu0 %v386
    %874 = vmatprep.subr.mxu0 0.0
    %875 = vmatpush1.msra.mxu0 0.0
    %876 = vmatprep.subr.mxu0 0.0
    %877 = vmatpush1.msra.mxu0 0.0
    %878 = vmatprep.subr.mxu0 0.0
    %879 = vmatpush1.msra.mxu0 0.0
    %880 = vmatprep.subr.mxu0 0.0
    %881 = vmatpush1.msra.mxu0 0.0
    %882 = vmatprep.subr.mxu0 0.0
    %883 = vmatpush1.msra.mxu0 0.0
    %884 = vmatprep.subr.mxu0 0.0
    %885 = vmatpush1.msra.mxu0 0.0
    %886 = vmatprep.subr.mxu0 0.0
    %887 = vmatpush1.msra.mxu0 0.0
    %888 = vmatprep.subr.mxu0 0.0
    %889 = vmatpush1.msra.mxu0 0.0
    %890 = vmatprep.subr.mxu0 0.0
    %891 = vmatpush1.msra.mxu0 0.0
    %892 = vmatprep.subr.mxu0 0.0
    %893 = vmatpush1.msra.mxu0 0.0
    %894 = vmatprep.subr.mxu0 0.0
    %895 = vmatpush1.msra.mxu0 0.0
    %896 = vmatprep.subr.mxu0 0.0
    %897 = vmatpush1.msra.mxu0 0.0
    %898 = vmatprep.subr.mxu0 0.0
    %899 = vmatpush1.msra.mxu0 0.0
    %900 = vmatprep.subr.mxu0 0.0
    %901 = vmatpush1.msra.mxu0 0.0
    %902 = vmatprep.subr.mxu0 0.0
    %903 = vmatpush1.msra.mxu0 0.0
    %904 = vmatprep.subr.mxu0 0.0
    %905 = vmatpush1.msra.mxu0 0.0
    %906 = vmatprep.subr.mxu0 0.0
    %907 = vmatpush1.msra.mxu0 0.0
    %908 = vmatprep.subr.mxu0 0.0
    %909 = vmatpush1.msra.mxu0 0.0
    %910 = vmatprep.subr.mxu0 0.0
    %911 = vmatpush1.msra.mxu0 0.0
    %912 = vmatprep.subr.mxu0 0.0
    %913 = vmatpush1.msra.mxu0 0.0
    %914 = vmatprep.subr.mxu0 0.0
    %915 = vmatpush1.msra.mxu0 0.0
    %916 = vmatprep.subr.mxu0 0.0
    %917 = vmatpush1.msra.mxu0 0.0
    %918 = vmatprep.subr.mxu0 0.0
    %919 = vmatpush1.msra.mxu0 0.0
    %920 = vmatprep.subr.mxu0 0.0
    %921 = vmatpush1.msra.mxu0 0.0
    %922 = vmatprep.subr.mxu0 0.0
    %923 = vmatpush1.msra.mxu0 0.0
    %924 = vmatprep.subr.mxu0 0.0
    %925 = vmatpush1.msra.mxu0 0.0
    %926 = vmatprep.subr.mxu0 0.0
    %927 = vmatpush1.msra.mxu0 0.0
    %928 = vmatprep.subr.mxu0 0.0
    %929 = vmatpush1.msra.mxu0 0.0
    %930 = vmatprep.mubr.f32.mxu0 0.0
    %931 = vmatmul.mubr.f32.gmra.mrb[0].mxu0 %v855
    %v932 = vpop.f32.mrb[0].mxu0
    %v933 = vadd.f32 0.0, %v932
    %v934 = vpop.f32.mrb[0].mxu0
    %935 = vmatprep.mubr.f32.mxu0 0.0
    %936 = vmatmul.mubr.f32.gmra.mrb[0].mxu0 %v858
    %v937 = vpop.f32.mrb[0].mxu0
    %v938 = vadd.f32 0.0, %v937
    %v939 = vpop.f32.mrb[0].mxu0
    %940 = vmatprep.mubr.f32.mxu0 0.0
    %941 = vmatmul.mubr.f32.gmra.mrb[0].mxu0 %v861
    %v942 = vpop.f32.mrb[0].mxu0
    %v943 = vadd.f32 0.0, %v942
    %v944 = vpop.f32.mrb[0].mxu0
    %945 = vmatprep.mubr.f32.mxu0 0.0
    %946 = vmatmul.mubr.f32.gmra.mrb[0].mxu0 %v864
    %v947 = vpop.f32.mrb[0].mxu0
    %v948 = vadd.f32 0.0, %v947
    %v949 = vpop.f32.mrb[0].mxu0
    %950 = vdwg.mxu0
    %v952 = vsel %vm35, %v846, 0
    %v955 = vsel %vm35, %v847, 0
    %v958 = vsel %vm35, %v848, 0
    %v961 = vsel %vm35, %v849, 0
    %963 = vmatprep.subr.mxu0 0.0
    %964 = vmatpush1.msra.mxu0 %v391
    %965 = vmatprep.subr.mxu0 0.0
    %966 = vmatpush1.msra.mxu0 %v396
    %967 = vmatprep.subr.mxu0 0.0
    %968 = vmatpush1.msra.mxu0 %v401
    %969 = vmatprep.subr.mxu0 0.0
    %970 = vmatpush1.msra.mxu0 %v406
    %971 = vmatprep.subr.mxu0 0.0
    %972 = vmatpush1.msra.mxu0 0.0
    %973 = vmatprep.subr.mxu0 0.0
    %974 = vmatpush1.msra.mxu0 0.0
    %975 = vmatprep.subr.mxu0 0.0
    %976 = vmatpush1.msra.mxu0 0.0
    %977 = vmatprep.subr.mxu0 0.0
    %978 = vmatpush1.msra.mxu0 0.0
    %979 = vmatprep.subr.mxu0 0.0
    %980 = vmatpush1.msra.mxu0 0.0
    %981 = vmatprep.subr.mxu0 0.0
    %982 = vmatpush1.msra.mxu0 0.0
    %983 = vmatprep.subr.mxu0 0.0
    %984 = vmatpush1.msra.mxu0 0.0
    %985 = vmatprep.subr.mxu0 0.0
    %986 = vmatpush1.msra.mxu0 0.0
    %987 = vmatprep.subr.mxu0 0.0
    %988 = vmatpush1.msra.mxu0 0.0
    %989 = vmatprep.subr.mxu0 0.0
    %990 = vmatpush1.msra.mxu0 0.0
    %991 = vmatprep.subr.mxu0 0.0
    %992 = vmatpush1.msra.mxu0 0.0
    %993 = vmatprep.subr.mxu0 0.0
    %994 = vmatpush1.msra.mxu0 0.0
    %995 = vmatprep.subr.mxu0 0.0
    %996 = vmatpush1.msra.mxu0 0.0
    %997 = vmatprep.subr.mxu0 0.0
    %998 = vmatpush1.msra.mxu0 0.0
    %999 = vmatprep.subr.mxu0 0.0
    %1000 = vmatpush1.msra.mxu0 0.0
    %1001 = vmatprep.subr.mxu0 0.0
    %1002 = vmatpush1.msra.mxu0 0.0
    %1003 = vmatprep.subr.mxu0 0.0
    %1004 = vmatpush1.msra.mxu0 0.0
    %1005 = vmatprep.subr.mxu0 0.0
    %1006 = vmatpush1.msra.mxu0 0.0
    %1007 = vmatprep.subr.mxu0 0.0
    %1008 = vmatpush1.msra.mxu0 0.0
    %1009 = vmatprep.subr.mxu0 0.0
    %1010 = vmatpush1.msra.mxu0 0.0
    %1011 = vmatprep.subr.mxu0 0.0
    %1012 = vmatpush1.msra.mxu0 0.0
    %1013 = vmatprep.subr.mxu0 0.0
    %1014 = vmatpush1.msra.mxu0 0.0
    %1015 = vmatprep.subr.mxu0 0.0
    %1016 = vmatpush1.msra.mxu0 0.0
    %1017 = vmatprep.subr.mxu0 0.0
    %1018 = vmatpush1.msra.mxu0 0.0
    %1019 = vmatprep.subr.mxu0 0.0
    %1020 = vmatpush1.msra.mxu0 0.0
    %1021 = vmatprep.subr.mxu0 0.0
    %1022 = vmatpush1.msra.mxu0 0.0
    %1023 = vmatprep.subr.mxu0 0.0
    %1024 = vmatpush1.msra.mxu0 0.0
    %1025 = vmatprep.subr.mxu0 0.0
    %1026 = vmatpush1.msra.mxu0 0.0
    %1027 = vmatprep.mubr.f32.mxu0 0.0
    %1028 = vmatmul.mubr.f32.gmra.mrb[0].mxu0 %v952
    %v1029 = vpop.f32.mrb[0].mxu0
    %v1030 = vadd.f32 0.0, %v1029
    %v1031 = vpop.f32.mrb[0].mxu0
    %1032 = vmatprep.mubr.f32.mxu0 0.0
    %1033 = vmatmul.mubr.f32.gmra.mrb[0].mxu0 %v955
    %v1034 = vpop.f32.mrb[0].mxu0
    %v1035 = vadd.f32 0.0, %v1034
    %v1036 = vpop.f32.mrb[0].mxu0
    %1037 = vmatprep.mubr.f32.mxu0 0.0
    %1038 = vmatmul.mubr.f32.gmra.mrb[0].mxu0 %v958
    %v1039 = vpop.f32.mrb[0].mxu0
    %v1040 = vadd.f32 0.0, %v1039
    %v1041 = vpop.f32.mrb[0].mxu0
    %1042 = vmatprep.mubr.f32.mxu0 0.0
    %1043 = vmatmul.mubr.f32.gmra.mrb[0].mxu0 %v961
    %v1044 = vpop.f32.mrb[0].mxu0
    %v1045 = vadd.f32 0.0, %v1044
    %v1046 = vpop.f32.mrb[0].mxu0
    %1047 = vdwg.mxu0
    %v1049 = vsel %vm35, %v850, 0
    %v1052 = vsel %vm35, %v851, 0
    %v1055 = vsel %vm35, %v852, 0
    %v1058 = vsel %vm35, %v853, 0
    %1060 = vmatprep.subr.mxu0 0.0
    %1061 = vmatpush1.msra.mxu0 %v411
    %1062 = vmatprep.subr.mxu0 0.0
    %1063 = vmatpush1.msra.mxu0 %v416
    %1064 = vmatprep.subr.mxu0 0.0
    %1065 = vmatpush1.msra.mxu0 %v421
    %1066 = vmatprep.subr.mxu0 0.0
    %1067 = vmatpush1.msra.mxu0 %v426
    %1068 = vmatprep.subr.mxu0 0.0
    %1069 = vmatpush1.msra.mxu0 0.0
    %1070 = vmatprep.subr.mxu0 0.0
    %1071 = vmatpush1.msra.mxu0 0.0
    %1072 = vmatprep.subr.mxu0 0.0
    %1073 = vmatpush1.msra.mxu0 0.0
    %1074 = vmatprep.subr.mxu0 0.0
    %1075 = vmatpush1.msra.mxu0 0.0
    %1076 = vmatprep.subr.mxu0 0.0
    %1077 = vmatpush1.msra.mxu0 0.0
    %1078 = vmatprep.subr.mxu0 0.0
    %1079 = vmatpush1.msra.mxu0 0.0
    %1080 = vmatprep.subr.mxu0 0.0
    %1081 = vmatpush1.msra.mxu0 0.0
    %1082 = vmatprep.subr.mxu0 0.0
    %1083 = vmatpush1.msra.mxu0 0.0
    %1084 = vmatprep.subr.mxu0 0.0
    %1085 = vmatpush1.msra.mxu0 0.0
    %1086 = vmatprep.subr.mxu0 0.0
    %1087 = vmatpush1.msra.mxu0 0.0
    %1088 = vmatprep.subr.mxu0 0.0
    %1089 = vmatpush1.msra.mxu0 0.0
    %1090 = vmatprep.subr.mxu0 0.0
    %1091 = vmatpush1.msra.mxu0 0.0
    %1092 = vmatprep.subr.mxu0 0.0
    %1093 = vmatpush1.msra.mxu0 0.0
    %1094 = vmatprep.subr.mxu0 0.0
    %1095 = vmatpush1.msra.mxu0 0.0
    %1096 = vmatprep.subr.mxu0 0.0
    %1097 = vmatpush1.msra.mxu0 0.0
    %1098 = vmatprep.subr.mxu0 0.0
    %1099 = vmatpush1.msra.mxu0 0.0
    %1100 = vmatprep.subr.mxu0 0.0
    %1101 = vmatpush1.msra.mxu0 0.0
    %1102 = vmatprep.subr.mxu0 0.0
    %1103 = vmatpush1.msra.mxu0 0.0
    %1104 = vmatprep.subr.mxu0 0.0
    %1105 = vmatpush1.msra.mxu0 0.0
    %1106 = vmatprep.subr.mxu0 0.0
    %1107 = vmatpush1.msra.mxu0 0.0
    %1108 = vmatprep.subr.mxu0 0.0
    %1109 = vmatpush1.msra.mxu0 0.0
    %1110 = vmatprep.subr.mxu0 0.0
    %1111 = vmatpush1.msra.mxu0 0.0
    %1112 = vmatprep.subr.mxu0 0.0
    %1113 = vmatpush1.msra.mxu0 0.0
    %1114 = vmatprep.subr.mxu0 0.0
    %1115 = vmatpush1.msra.mxu0 0.0
    %1116 = vmatprep.subr.mxu0 0.0
    %1117 = vmatpush1.msra.mxu0 0.0
    %1118 = vmatprep.subr.mxu0 0.0
    %1119 = vmatpush1.msra.mxu0 0.0
    %1120 = vmatprep.subr.mxu0 0.0
    %1121 = vmatpush1.msra.mxu0 0.0
    %1122 = vmatprep.subr.mxu0 0.0
    %1123 = vmatpush1.msra.mxu0 0.0
    %1124 = vmatprep.mubr.f32.mxu0 0.0
    %1125 = vmatmul.mubr.f32.gmra.mrb[0].mxu0 %v1049
    %v1126 = vpop.f32.mrb[0].mxu0
    %v1127 = vadd.f32 0.0, %v1126
    %v1128 = vpop.f32.mrb[0].mxu0
    %1129 = vmatprep.mubr.f32.mxu0 0.0
    %1130 = vmatmul.mubr.f32.gmra.mrb[0].mxu0 %v1052
    %v1131 = vpop.f32.mrb[0].mxu0
    %v1132 = vadd.f32 0.0, %v1131
    %v1133 = vpop.f32.mrb[0].mxu0
    %1134 = vmatprep.mubr.f32.mxu0 0.0
    %1135 = vmatmul.mubr.f32.gmra.mrb[0].mxu0 %v1055
    %v1136 = vpop.f32.mrb[0].mxu0
    %v1137 = vadd.f32 0.0, %v1136
    %v1138 = vpop.f32.mrb[0].mxu0
    %1139 = vmatprep.mubr.f32.mxu0 0.0
    %1140 = vmatmul.mubr.f32.gmra.mrb[0].mxu0 %v1058
    %v1141 = vpop.f32.mrb[0].mxu0
    %v1142 = vadd.f32 0.0, %v1141
    %v1143 = vpop.f32.mrb[0].mxu0
    %1144 = vdwg.mxu0
    %1145 = vst.msk [vmem:[#allocation2] sm:$0xff] %vm35, %v933
    %1146 = vst.msk [vmem:[#allocation2 + $0x8] sm:$0xff] %vm35, %v938
    %1147 = vst.msk [vmem:[#allocation2 + $0x10] sm:$0xff] %vm35, %v943
    %1148 = vst.msk [vmem:[#allocation2 + $0x18] sm:$0xff] %vm35, %v948
    %1149 = vst.msk [vmem:[#allocation2 + $0x20] sm:$0xff] %vm35, %v1030
    %1150 = vst.msk [vmem:[#allocation2 + $0x28] sm:$0xff] %vm35, %v1035
    %1151 = vst.msk [vmem:[#allocation2 + $0x30] sm:$0xff] %vm35, %v1040
    %1152 = vst.msk [vmem:[#allocation2 + $0x38] sm:$0xff] %vm35, %v1045
    %1153 = vst.msk [vmem:[#allocation2 + $0x40] sm:$0xff] %vm35, %v1127
    %1154 = vst.msk [vmem:[#allocation2 + $0x48] sm:$0xff] %vm35, %v1132
    %1155 = vst.msk [vmem:[#allocation2 + $0x50] sm:$0xff] %vm35, %v1137
    %1156 = vst.msk [vmem:[#allocation2 + $0x58] sm:$0xff] %vm35, %v1142
    // Predicated region
    $region14: #{model_forward.1} parent=1 // pred_check
      _
    $region15: #{model_forward.1} parent=1 // pred_check_branch
      %1158 = sbr.rel (0) target = $region17
    $region16: #{model_forward.1} parent=1 // pred_region
      %s1160 = ssub.s32 1536, 1536
      %1161 = vsyncadd [#allocation3], %s1160
      %s1162 = sshll.u32 [#allocation2], 4
      %s1163 = int_to_ptr.vmem [resolvable:$true] %s1162
      %1168 = dma.vmem_to_hbm [thread:$0]  %s1163, 1536, %s3, [#allocation3], 128, 128, 8
    $region17: #{model_forward.1} parent=1 // pred_fallthru
      _
    // Predicated region
    $region18: #{model_forward.1} parent=1 // pred_check
      _
    $region19: #{model_forward.1} parent=1 // pred_check_branch
      %1170 = sbr.rel (0) target = $region21
    $region20: #{model_forward.1} parent=1 // pred_region
      %1171 = dma.done [#allocation3], 1536
    $region21: #{model_forward.1} parent=1 // pred_fallthru
      _
    %1172 = vsyncpa [#allocation3], 1

</llo_original>
